<compile_context>
chip_gen: v6e
topology: v6e:2x2x1
jax: 0.10.0
libtpu: 0.0.40
codegen_flags: <defaults>
</compile_context>

<pallas_src>
import jax
import jax.numpy as jnp
from jax.experimental import pallas as pl
from jax.experimental.pallas import tpu as pltpu

_TILE_BYTES = 4 * 1024 * 1024          # target bytes of x per tile (~2-4 MiB sweet spot)
_VMEM_LIMIT = 32 * 1024 * 1024         # safe scoped-VMEM ceiling on v5e/v6e/v7x


def _layer_scale_kernel(x_ref, s_ref, o_ref):
    # s_ref is (rb, 1) (per-row scale) or (1, lb) (per-lane scale); broadcasting
    # handles both.  Scale was already cast to x.dtype in the wrapper.
    o_ref[...] = x_ref[...] * s_ref[...]


def _sublane_align(dtype):
    """Second-minor alignment: 8 for 4-byte, 16 for 2-byte, 32 for 1-byte dtypes."""
    itemsize = jnp.dtype(dtype).itemsize
    return max(8, 32 // max(itemsize, 1))


def _choose_tile(rows, cols, itemsize, sub_align, tile_bytes):
    """Byte-budgeted (rb, lb) tile.  Never exceeds tile_bytes even after sublane
    padding; never falls back to a full dimension that would blow the budget."""
    # Lane (last) axis: full extent if a sub_align-row slab of it fits the budget,
    # otherwise the largest multiple of 128 that does (edge blocks are masked).
    lane_budget = max(128, tile_bytes // (sub_align * itemsize))
    if cols <= lane_budget:
        lb = cols
    else:
        lb = max(128, (lane_budget // 128) * 128)
    # Sublane (second-minor) axis: grow (multiple of sub_align) to fill the budget.
    rb_budget = max(1, tile_bytes // (lb * itemsize))
    if rows <= rb_budget:
        rb = rows
    else:
        rb = max(sub_align, (rb_budget // sub_align) * sub_align)
    return rb, lb


@jax.jit
def layer_scale(x, scale):
    """x: (B, C, L); scale: (1, C, 1) (PyTorch LayerScale parameter layout)."""
    B, C, L = x.shape
    itemsize = jnp.dtype(x.dtype).itemsize
    sub_align = _sublane_align(x.dtype)

    s = scale.reshape(1, C, 1).astype(x.dtype)   # cast once in the wrapper

    if L >= 128:
        # Case A: channels (and batch) on the sublane axis, length on lanes.
        rows, cols = B * C, L
        x2 = x.reshape(rows, cols)
        s2 = jnp.broadcast_to(s, (B, C, 1)).reshape(rows, 1)
        per_row_scale = True
    else:
        # Case B: lane-sparse L -- fold (C, L) into one dense lane axis so output
        # stores are not masked partial stores.
        rows, cols = B, C * L
        x2 = x.reshape(rows, cols)
        s2 = jnp.broadcast_to(s.reshape(C, 1), (C, L)).reshape(1, cols)
        per_row_scale = False

    rb, lb = _choose_tile(rows, cols, itemsize, sub_align, _TILE_BYTES)
    grid = (pl.cdiv(rows, rb), pl.cdiv(cols, lb))

    if per_row_scale:
        s_spec = pl.BlockSpec((rb, 1), lambda i, j: (i, 0))
    else:
        s_spec = pl.BlockSpec((1, lb), lambda i, j: (0, j))

    out2 = pl.pallas_call(
        _layer_scale_kernel,
        out_shape=jax.ShapeDtypeStruct((rows, cols), x.dtype),
        grid=grid,
        in_specs=[
            pl.BlockSpec((rb, lb), lambda i, j: (i, j)),   # x tile
            s_spec,                                        # scale tile
        ],
        out_specs=pl.BlockSpec((rb, lb), lambda i, j: (i, j)),
        compiler_params=pltpu.CompilerParams(
            dimension_semantics=("parallel", "parallel"),
            vmem_limit_bytes=_VMEM_LIMIT,
        ),
    )(x2, s2)
    return out2.reshape(B, C, L)


if __name__ == "__main__":
    key = jax.random.PRNGKey(0)
    k1, k2, k3, k4 = jax.random.split(key, 4)

    # 1) Small shape consistent with the module (lane-sparse path: L < 128).
    B, C, L = 2, 4, 16
    x = jax.random.normal(k1, (B, C, L), dtype=jnp.float32)
    scale = jnp.full((1, C, 1), 1e-5, dtype=jnp.float32)
    out = layer_scale(x, scale)
    jax.block_until_ready(out)
    assert out.shape == (B, C, L)
    assert bool(jnp.allclose(out, x * scale, rtol=1e-6, atol=1e-6))

    # 2) Lane-dense path (L >= 128), (8,128)-aligned.
    B2, C2, L2 = 4, 64, 512
    x2 = jax.random.normal(k2, (B2, C2, L2), dtype=jnp.float32)
    scale2 = 1e-5 * jnp.ones((1, C2, 1), dtype=jnp.float32)
    out2 = layer_scale(x2, scale2)
    jax.block_until_ready(out2)
    assert bool(jnp.allclose(out2, x2 * scale2, rtol=1e-6, atol=1e-6))

    # 3) Ragged, non-aligned shape (exercises full-extent / edge handling).
    B3, C3, L3 = 2, 12, 300
    x3 = jax.random.normal(k3, (B3, C3, L3), dtype=jnp.float32)
    scale3 = jax.random.normal(k4, (1, C3, 1), dtype=jnp.float32) * 1e-5
    out3 = layer_scale(x3, scale3)
    jax.block_until_ready(out3)
    assert bool(jnp.allclose(out3, x3 * scale3, rtol=1e-6, atol=1e-6))

    # 4) bf16 activations with f32 parameter (wrapper-side cast, dtype-aware align).
    B4, C4, L4 = 2, 16, 128
    x4 = jax.random.normal(k4, (B4, C4, L4), dtype=jnp.bfloat16)
    scale4 = jnp.full((1, C4, 1), 1e-5, dtype=jnp.float32)
    out4 = layer_scale(x4, scale4)
    jax.block_until_ready(out4)
    ref4 = x4 * scale4.astype(jnp.bfloat16)
    assert out4.dtype == jnp.bfloat16
    assert bool(jnp.allclose(out4.astype(jnp.float32), ref4.astype(jnp.float32),
                             rtol=1e-2, atol=1e-7))

    print("KERNEL_OK")
</pallas_src>

<mosaic_0001>
module attributes {stable_mosaic.version = 11 : i64} {
  func.func @_layer_scale_kernel(%arg0: i32, %arg1: i32, %arg2: memref<2x64xf32, #tpu.memory_space<vmem>>, %arg3: memref<1x64xf32, #tpu.memory_space<vmem>>, %arg4: memref<2x64xf32, #tpu.memory_space<vmem>>) attributes {dimension_semantics = [#tpu.dimension_semantics<parallel>, #tpu.dimension_semantics<parallel>], iteration_bounds = array<i64: 1, 1>, scalar_prefetch = 0 : i64, scratch_operands = 0 : i64, tpu.core_type = #tpu.core_type<tc>, window_params = [{transform_indices = @transform_0, window_bounds = array<i64: 2, 64>}, {transform_indices = @transform_1, window_bounds = array<i64: 1, 64>}, {transform_indices = @transform_2, window_bounds = array<i64: 2, 64>}]} {
    %c0 = arith.constant 0 : index
    %c0_0 = arith.constant 0 : index
    %0 = vector.load %arg2[%c0, %c0_0] : memref<2x64xf32, #tpu.memory_space<vmem>>, vector<2x64xf32>
    %c0_1 = arith.constant 0 : index
    %c0_2 = arith.constant 0 : index
    %1 = vector.load %arg3[%c0_1, %c0_2] : memref<1x64xf32, #tpu.memory_space<vmem>>, vector<1x64xf32>
    %2 = vector.broadcast %1 : vector<1x64xf32> to vector<2x64xf32>
    %3 = arith.mulf %0, %2 : vector<2x64xf32>
    %c0_3 = arith.constant 0 : index
    %c0_4 = arith.constant 0 : index
    %4 = vector.load %arg4[%c0_3, %c0_4] : memref<2x64xf32, #tpu.memory_space<vmem>>, vector<2x64xf32>
    tpu.vector_store %arg4[%c0_3, %c0_4], %3 {strides = array<i32>} : memref<2x64xf32, #tpu.memory_space<vmem>>, vector<2x64xf32>,
    return
  }
  func.func @transform_0(%arg0: i32, %arg1: i32) -> (i32, i32) {
    %c0_i32 = arith.constant 0 : i32
    return %arg0, %arg1 : i32, i32
  }
  func.func @transform_1(%arg0: i32, %arg1: i32) -> (i32, i32) {
    %c0_i32 = arith.constant 0 : i32
    %c0_i32_0 = arith.constant 0 : i32
    return %c0_i32, %arg1 : i32, i32
  }
  func.func @transform_2(%arg0: i32, %arg1: i32) -> (i32, i32) {
    %c0_i32 = arith.constant 0 : i32
    return %arg0, %arg1 : i32, i32
  }
}

</mosaic_0001>

<llo_original>
// kernel: layer_scale.1
$region0: #{layer_scale.1}
  #allocation0 [shape = 'u32[]', space=smem, size = 0x4, offset = 0x4, fixed_abs, tag = 'smem constant byte address 0x4 - core index']
  #allocation1 [shape = 'u32[144,128]{1,0:T(1,128)}', space=vmem, size = 0x12000, scoped, tag = 'internal scratch']
  %s0 = inlined_call_operand.vmem [shape: f32[2,64], index: 0, kind: input, shape index: {}]
  %s1 = inlined_call_operand.vmem [shape: f32[1,64], index: 1, kind: input, shape index: {}]
  %s2 = inlined_call_operand.vmem [shape: f32[2,64], index: 2, kind: output, shape index: {}]
  %s3 = sld [smem:[#allocation0]]
  $region18: #{layer_scale.1} parent=0
    _
  %s5 = ssub.s32 1, %s3
  %s6 = scalar_select 0, %s5, %s3
  // Predicated region
  $region2: #{layer_scale.1} parent=0 // pred_check
    _
  $region3: #{layer_scale.1} parent=0 // pred_check_branch
    %8 = sbr.rel (0) target = $region5
  $region4: #{layer_scale.1} parent=0 // pred_region
    _
  $region5: #{layer_scale.1} parent=0 // pred_fallthru
    _
  // Predicated region
  $region6: #{layer_scale.1} parent=0 // pred_check
    _
  $region7: #{layer_scale.1} parent=0 // pred_check_branch
    %10 = sbr.rel (0) target = $region9
  $region8: #{layer_scale.1} parent=0 // pred_region
    _
  $region9: #{layer_scale.1} parent=0 // pred_fallthru
    _
  %v11 = vld [vmem:[%s0] sm:$0x3]
  %v12 = vld [vmem:[%s1] sm:$0x1]
  %v14 = vlaneseq
  %v15 = vshrl.u32 %v14, 7
  %v16 = vsub.s32 0, %v15
  %v17 = vrot.slane %v12, %v16
  %v19 = vmul.f32 %v11, %v17
  %vm20 = vcmask 517120
  %21 = vst.msk [vmem:[%s2] sm:$0x3] %vm20, %v19
  // Predicated region
  $region10: #{layer_scale.1} parent=0 // pred_check
    _
  $region11: #{layer_scale.1} parent=0 // pred_check_branch
    %23 = sbr.rel (0) target = $region13
  $region12: #{layer_scale.1} parent=0 // pred_region
    _
  $region13: #{layer_scale.1} parent=0 // pred_fallthru
    _
  // Predicated region
  $region14: #{layer_scale.1} parent=0 // pred_check
    _
  $region15: #{layer_scale.1} parent=0 // pred_check_branch
    %25 = sbr.rel (0) target = $region17
  $region16: #{layer_scale.1} parent=0 // pred_region
    _
  $region17: #{layer_scale.1} parent=0 // pred_fallthru
    _

</llo_original>
